<compile_context>
chip_gen: v6e
topology: v6e:2x2x1
jax: 0.10.0
libtpu: 0.0.40
codegen_flags: <defaults>
</compile_context>

<pallas_src>
import functools

import jax
import jax.numpy as jnp
from jax.experimental import pallas as pl
from jax.experimental.pallas import tpu as pltpu


# ----------------------------------------------------------------------------
# Kernel
# ----------------------------------------------------------------------------
def layer_norm_kernel(x_ref, a_ref, b_ref, o_ref, *, eps):
    x = x_ref[...].astype(jnp.float32)                    # (tr, D)
    d = x.shape[-1]
    mean = jnp.mean(x, axis=-1, keepdims=True)            # (tr, 1)
    xc = x - mean
    # torch's .std() is unbiased: divide by (D - 1)
    var = jnp.sum(xc * xc, axis=-1, keepdims=True) * (1.0 / jnp.float32(d - 1))
    std = jnp.sqrt(var)
    inv = 1.0 / (std + jnp.float32(eps))                  # exact (keeps 1e-5 tol)
    out = xc * inv * a_ref[...] + b_ref[...]              # (1, D) params broadcast
    o_ref[...] = out.astype(o_ref.dtype)


# ----------------------------------------------------------------------------
# Wrapper
# ----------------------------------------------------------------------------
def _choose_row_tile(n, d, *, bytes_per_elem=4, vmem_budget=4 * 1024 * 1024,
                     max_rows=1024):
    """Largest row tile (multiple of 8) whose in+out double buffers fit budget."""
    if n <= 8:
        return n
    per_row = d * bytes_per_elem
    # x tile + out tile, each double-buffered  -> ~4 live copies of (tr, D)
    budget_rows = max(8, vmem_budget // (4 * max(per_row, 1)))
    tr = min(n, max_rows, budget_rows)
    tr = max(8, (tr // 8) * 8)
    return tr


def pallas_layer_norm(x, a_2, b_2, eps=1e-6):
    """LayerNorm over the last axis; leading axes are flattened into rows."""
    orig_shape = x.shape
    orig_dtype = x.dtype
    d = orig_shape[-1]
    x2 = x.reshape(-1, d).astype(jnp.float32)
    n = x2.shape[0]

    tr = _choose_row_tile(n, d)
    grid = (pl.cdiv(n, tr),)

    a2 = a_2.reshape(1, d).astype(jnp.float32)
    b2 = b_2.reshape(1, d).astype(jnp.float32)

    cost = pl.CostEstimate(
        flops=8 * n * d,                       # sub, sq, sum, scale, mul, add, ...
        transcendentals=2 * n,                 # sqrt + reciprocal per row
        bytes_accessed=(2 * n * d + 2 * d) * 4,
    )

    out = pl.pallas_call(
        functools.partial(layer_norm_kernel, eps=eps),
        grid=grid,
        in_specs=[
            pl.BlockSpec((tr, d), lambda i: (i, 0)),   # x rows
            pl.BlockSpec((1, d), lambda i: (0, 0)),    # a_2 (broadcast, pinned)
            pl.BlockSpec((1, d), lambda i: (0, 0)),    # b_2 (broadcast, pinned)
        ],
        out_specs=pl.BlockSpec((tr, d), lambda i: (i, 0)),
        out_shape=jax.ShapeDtypeStruct((n, d), orig_dtype),
        compiler_params=pltpu.CompilerParams(dimension_semantics=("parallel",)),
        cost_estimate=cost,
    )(x2, a2, b2)
    return out.reshape(orig_shape)


class LayerNormPallas:
    """Pallas port of LayerNorm(features, eps=1e-6)."""

    def __init__(self, features, eps=1e-6):
        self.a_2 = jnp.ones((features,), jnp.float32)
        self.b_2 = jnp.zeros((features,), jnp.float32)
        self.eps = eps

    def __call__(self, x):
        return pallas_layer_norm(x, self.a_2, self.b_2, self.eps)


# ----------------------------------------------------------------------------
# Pure-JAX reference (mirrors the torch forward)
# ----------------------------------------------------------------------------
def reference_layer_norm(x, a_2, b_2, eps):
    mean = jnp.mean(x, axis=-1, keepdims=True)
    std = jnp.std(x, axis=-1, keepdims=True, ddof=1)   # unbiased, like torch
    return a_2 * (x - mean) / (std + eps) + b_2


# ----------------------------------------------------------------------------
if __name__ == "__main__":
    B, S, D = 2, 8, 32
    root = jax.random.PRNGKey(0)
    kx, ka, kb = jax.random.split(root, 3)

    ln = LayerNormPallas(D, eps=1e-6)
    # non-trivial (as-if-learned) scale/shift so the test exercises a_2 / b_2
    ln.a_2 = jax.random.normal(ka, (D,), jnp.float32)
    ln.b_2 = jax.random.normal(kb, (D,), jnp.float32)

    x = jax.random.normal(kx, (B, S, D), jnp.float32)

    out = ln(x)
    out = jax.block_until_ready(out)

    ref = reference_layer_norm(x, ln.a_2, ln.b_2, ln.eps)
    assert out.shape == x.shape
    assert jnp.allclose(out, ref, atol=1e-5, rtol=1e-5), "mismatch vs reference"

    print("KERNEL_OK")
</pallas_src>

<mosaic_0001>
module attributes {stable_mosaic.version = 11 : i64} {
  func.func @layer_norm_kernel(%arg0: i32, %arg1: memref<16x32xf32, #tpu.memory_space<vmem>>, %arg2: memref<1x32xf32, #tpu.memory_space<vmem>>, %arg3: memref<1x32xf32, #tpu.memory_space<vmem>>, %arg4: memref<16x32xf32, #tpu.memory_space<vmem>>) attributes {dimension_semantics = [#tpu.dimension_semantics<parallel>], iteration_bounds = array<i64: 1>, scalar_prefetch = 0 : i64, scratch_operands = 0 : i64, tpu.core_type = #tpu.core_type<tc>, window_params = [{transform_indices = @transform_0, window_bounds = array<i64: 16, 32>}, {pipeline_mode = #tpu.pipeline_mode<synchronous>, transform_indices = @transform_1, window_bounds = array<i64: 1, 32>}, {pipeline_mode = #tpu.pipeline_mode<synchronous>, transform_indices = @transform_2, window_bounds = array<i64: 1, 32>}, {transform_indices = @transform_3, window_bounds = array<i64: 16, 32>}]} {
    %c0 = arith.constant 0 : index
    %c0_0 = arith.constant 0 : index
    %0 = vector.load %arg1[%c0, %c0_0] : memref<16x32xf32, #tpu.memory_space<vmem>>, vector<16x32xf32>
    %cst = arith.constant dense<0.000000e+00> : vector<16xf32>
    %1 = vector.multi_reduction <add>, %0, %cst [1] : vector<16x32xf32> to vector<16xf32>
    %2 = vector.shape_cast %1 : vector<16xf32> to vector<16x1xf32>
    %cst_1 = arith.constant 3.200000e+01 : f32
    %3 = vector.broadcast %cst_1 : f32 to vector<16x1xf32>
    %4 = arith.divf %2, %3 : vector<16x1xf32>
    %5 = vector.broadcast %4 : vector<16x1xf32> to vector<16x32xf32>
    %6 = arith.subf %0, %5 : vector<16x32xf32>
    %7 = arith.mulf %6, %6 : vector<16x32xf32>
    %cst_2 = arith.constant dense<0.000000e+00> : vector<16xf32>
    %8 = vector.multi_reduction <add>, %7, %cst_2 [1] : vector<16x32xf32> to vector<16xf32>
    %9 = vector.shape_cast %8 : vector<16xf32> to vector<16x1xf32>
    %cst_3 = arith.constant 1.000000e+00 : f32
    %cst_4 = arith.constant 3.100000e+01 : f32
    %10 = arith.divf %cst_3, %cst_4 : f32
    %11 = vector.broadcast %10 : f32 to vector<16x1xf32>
    %12 = arith.mulf %9, %11 : vector<16x1xf32>
    %13 = math.sqrt %12 : vector<16x1xf32>
    %cst_5 = arith.constant 9.99999997E-7 : f32
    %14 = vector.broadcast %cst_5 : f32 to vector<16x1xf32>
    %15 = arith.addf %13, %14 : vector<16x1xf32>
    %cst_6 = arith.constant 1.000000e+00 : f32
    %16 = vector.broadcast %cst_6 : f32 to vector<16x1xf32>
    %17 = arith.divf %16, %15 : vector<16x1xf32>
    %18 = vector.broadcast %17 : vector<16x1xf32> to vector<16x32xf32>
    %19 = arith.mulf %6, %18 : vector<16x32xf32>
    %c0_7 = arith.constant 0 : index
    %c0_8 = arith.constant 0 : index
    %20 = vector.load %arg2[%c0_7, %c0_8] : memref<1x32xf32, #tpu.memory_space<vmem>>, vector<1x32xf32>
    %21 = vector.broadcast %20 : vector<1x32xf32> to vector<16x32xf32>
    %22 = arith.mulf %19, %21 : vector<16x32xf32>
    %c0_9 = arith.constant 0 : index
    %c0_10 = arith.constant 0 : index
    %23 = vector.load %arg3[%c0_9, %c0_10] : memref<1x32xf32, #tpu.memory_space<vmem>>, vector<1x32xf32>
    %24 = vector.broadcast %23 : vector<1x32xf32> to vector<16x32xf32>
    %25 = arith.addf %22, %24 : vector<16x32xf32>
    %c0_11 = arith.constant 0 : index
    %c0_12 = arith.constant 0 : index
    %26 = vector.load %arg4[%c0_11, %c0_12] : memref<16x32xf32, #tpu.memory_space<vmem>>, vector<16x32xf32>
    tpu.vector_store %arg4[%c0_11, %c0_12], %25 {strides = array<i32>} : memref<16x32xf32, #tpu.memory_space<vmem>>, vector<16x32xf32>,
    return
  }
  func.func @transform_0(%arg0: i32) -> (i32, i32) {
    %c0_i32 = arith.constant 0 : i32
    %c0_i32_0 = arith.constant 0 : i32
    return %arg0, %c0_i32 : i32, i32
  }
  func.func @transform_1(%arg0: i32) -> (i32, i32) {
    %c0_i32 = arith.constant 0 : i32
    %c0_i32_0 = arith.constant 0 : i32
    %c0_i32_1 = arith.constant 0 : i32
    return %c0_i32, %c0_i32_0 : i32, i32
  }
  func.func @transform_2(%arg0: i32) -> (i32, i32) {
    %c0_i32 = arith.constant 0 : i32
    %c0_i32_0 = arith.constant 0 : i32
    %c0_i32_1 = arith.constant 0 : i32
    return %c0_i32, %c0_i32_0 : i32, i32
  }
  func.func @transform_3(%arg0: i32) -> (i32, i32) {
    %c0_i32 = arith.constant 0 : i32
    %c0_i32_0 = arith.constant 0 : i32
    return %arg0, %c0_i32 : i32, i32
  }
}

</mosaic_0001>

<llo_original>
// kernel: tpu_custom_call.1
$region0: #{tpu_custom_call.1}
  #allocation0 [shape = 'u32[]', space=smem, size = 0x4, offset = 0x4, fixed_abs, tag = 'smem constant byte address 0x4 - core index']
  #allocation1 [shape = 'u32[144,128]{1,0:T(1,128)}', space=vmem, size = 0x12000, scoped, tag = 'internal scratch']
  %s0 = inlined_call_operand.hbm [shape: f32[16,32], index: 0, kind: input, shape index: {}]
  %s1 = inlined_call_operand.vmem [shape: f32[1,32], index: 1, kind: input, shape index: {}]
  %s2 = inlined_call_operand.vmem [shape: f32[1,32], index: 2, kind: input, shape index: {}]
  %s3 = inlined_call_operand.hbm [shape: f32[16,32], index: 3, kind: output, shape index: {}]
  %s4 = sld [smem:[#allocation0]]
  $region26: #{tpu_custom_call.1} parent=0
    _
  %s6 = ssub.s32 1, %s4
  %s7 = scalar_select 0, %s6, %s4
  $region1: #{tpu_custom_call.1} parent=0
    #allocation2 [shape = 'u8[8192]{0}', space=vmem, size = 0x2000, scoped, tag = 'input window, operand 0, single buffered']
    #allocation3 [shape = 's32[1]{0}', space=sflag, size = 0x4, scoped, tag = 'scoped memory for tpu_custom_call.1']
    #allocation4 [shape = 's32[1]{0}', space=sflag, size = 0x4, scoped, tag = 'scoped memory for tpu_custom_call.1']
    #allocation5 [shape = 'u8[8192]{0}', space=vmem, size = 0x2000, scoped, tag = 'output window, operand 0, single buffered']
    %8 = vsyncpa [#allocation3], 0
    %9 = vsyncpa [#allocation4], 0
    // Predicated region
    $region2: #{tpu_custom_call.1} parent=1 // pred_check
      _
    $region3: #{tpu_custom_call.1} parent=1 // pred_check_branch
      %11 = sbr.rel (0) target = $region5
    $region4: #{tpu_custom_call.1} parent=1 // pred_region
      %s13 = ssub.s32 256, 256
      %14 = vsyncadd [#allocation3], %s13
      %s15 = sshll.u32 [#allocation2], 4
      %s16 = int_to_ptr.vmem [resolvable:$true] %s15
      %21 = dma.hbm_to_vmem [thread:$0]  %s0, 256, %s16, [#allocation3], 128, 128, 8
    $region5: #{tpu_custom_call.1} parent=1 // pred_fallthru
      _
    // Predicated region
    $region6: #{tpu_custom_call.1} parent=1 // pred_check
      _
    $region7: #{tpu_custom_call.1} parent=1 // pred_check_branch
      %23 = sbr.rel (0) target = $region9
    $region8: #{tpu_custom_call.1} parent=1 // pred_region
      _
    $region9: #{tpu_custom_call.1} parent=1 // pred_fallthru
      _
    // Predicated region
    $region10: #{tpu_custom_call.1} parent=1 // pred_check
      _
    $region11: #{tpu_custom_call.1} parent=1 // pred_check_branch
      %25 = sbr.rel (0) target = $region13
    $region12: #{tpu_custom_call.1} parent=1 // pred_region
      _
    $region13: #{tpu_custom_call.1} parent=1 // pred_fallthru
      _
    // Predicated region
    $region14: #{tpu_custom_call.1} parent=1 // pred_check
      _
    $region15: #{tpu_custom_call.1} parent=1 // pred_check_branch
      %27 = sbr.rel (0) target = $region17
    $region16: #{tpu_custom_call.1} parent=1 // pred_region
      %28 = dma.done [#allocation3], 256
    $region17: #{tpu_custom_call.1} parent=1 // pred_fallthru
      _
    %v29 = vld [vmem:[#allocation2] sm:$0xff]
    %v30 = vld [vmem:[#allocation2 + $0x8] sm:$0xff]
    %vm31 = vcmask 261120
    %v32 = vsel %vm31, %v29, 0.0
    %33 = vadd.xlane.f32.xlu0 %v32
    %v34 = vpop.xlane.xlu0 %33
    %v35 = vsel %vm31, %v30, 0.0
    %36 = vadd.xlane.f32.xlu0 %v35
    %v37 = vpop.xlane.xlu0 %36
    %v38 = vrcp.pop 32.0
    %v39 = vmul.f32 %v34, %v38
    %v40 = vmul.f32 %v37, %v38
    %v41 = vsub.f32 %v29, %v39
    %v42 = vsub.f32 %v30, %v40
    %v43 = vmul.f32 %v41, %v41
    %v44 = vmul.f32 %v42, %v42
    %v45 = vsel %vm31, %v43, 0.0
    %46 = vadd.xlane.f32.xlu0 %v45
    %v47 = vpop.xlane.xlu0 %46
    %v48 = vsel %vm31, %v44, 0.0
    %49 = vadd.xlane.f32.xlu0 %v48
    %v50 = vpop.xlane.xlu0 %49
    %v51 = vmul.f32 %v47, 0.032258064
    %v52 = vmul.f32 %v50, 0.032258064
    %v53 = vrsqrt.pop %v51
    %v54 = vmul.f32 %v51, %v53
    %vm55 = vcmp.eq.f32.partialorder %v51, inf
    %v56 = vsel %vm55, %v51, %v54
    %vm57 = vcmp.eq.f32.partialorder %v51, 0.0
    %v58 = vand.u32 %v51, 2147483648
    %v59 = vsel %vm57, %v58, %v56
    %v60 = vrsqrt.pop %v52
    %v61 = vmul.f32 %v52, %v60
    %vm62 = vcmp.eq.f32.partialorder %v52, inf
    %v63 = vsel %vm62, %v52, %v61
    %vm64 = vcmp.eq.f32.partialorder %v52, 0.0
    %v65 = vand.u32 %v52, 2147483648
    %v66 = vsel %vm64, %v65, %v63
    %v67 = vadd.f32 %v59, 1e-06
    %v68 = vadd.f32 %v66, 1e-06
    %v69 = vrcp.pop %v67
    %v70 = vmul.f32 1.0, %v69
    %v71 = vrcp.pop %v68
    %v72 = vmul.f32 1.0, %v71
    %v73 = vmul.f32 %v41, %v70
    %v74 = vmul.f32 %v42, %v72
    %v75 = vld [vmem:[%s1] sm:$0x1]
    %v77 = vlaneseq
    %v78 = vshrl.u32 %v77, 7
    %v79 = vsub.s32 0, %v78
    %v80 = vrot.slane %v75, %v79
    %v82 = vmul.f32 %v73, %v80
    %v83 = vmul.f32 %v74, %v80
    %v84 = vld [vmem:[%s2] sm:$0x1]
    %v86 = vlaneseq
    %v87 = vshrl.u32 %v86, 7
    %v88 = vsub.s32 0, %v87
    %v89 = vrot.slane %v84, %v88
    %v91 = vadd.f32 %v82, %v89
    %v92 = vadd.f32 %v83, %v89
    %93 = vst.msk [vmem:[#allocation5] sm:$0xff] %vm31, %v91
    %94 = vst.msk [vmem:[#allocation5 + $0x8] sm:$0xff] %vm31, %v92
    // Predicated region
    $region18: #{tpu_custom_call.1} parent=1 // pred_check
      _
    $region19: #{tpu_custom_call.1} parent=1 // pred_check_branch
      %96 = sbr.rel (0) target = $region21
    $region20: #{tpu_custom_call.1} parent=1 // pred_region
      %s98 = ssub.s32 256, 256
      %99 = vsyncadd [#allocation4], %s98
      %s100 = sshll.u32 [#allocation5], 4
      %s101 = int_to_ptr.vmem [resolvable:$true] %s100
      %106 = dma.vmem_to_hbm [thread:$0]  %s101, 256, %s3, [#allocation4], 128, 128, 8
    $region21: #{tpu_custom_call.1} parent=1 // pred_fallthru
      _
    // Predicated region
    $region22: #{tpu_custom_call.1} parent=1 // pred_check
      _
    $region23: #{tpu_custom_call.1} parent=1 // pred_check_branch
      %108 = sbr.rel (0) target = $region25
    $region24: #{tpu_custom_call.1} parent=1 // pred_region
      %109 = dma.done [#allocation4], 256
    $region25: #{tpu_custom_call.1} parent=1 // pred_fallthru
      _
    %110 = vsyncpa [#allocation3], 1
    %111 = vsyncpa [#allocation4], 1

</llo_original>
